<compile_context>
chip_gen: v5e
topology: v5e:2x2
jax: 0.10.0
libtpu: 0.0.40
codegen_flags: <defaults>
</compile_context>

<pallas_src>
import jax
import jax.numpy as jnp
from jax.experimental import pallas as pl
from jax.experimental.pallas import tpu as pltpu

# ----------------------------- config ---------------------------------------
SEQ_LEN = 16      # configs.seq_len
PRED_LEN = 8      # configs.pred_len
ENC_IN = 4        # configs.enc_in
D_MODEL = 32      # configs.d_model
E_LAYERS = 2      # configs.e_layers
EPS = 1e-5

MAX_ROW_TILE = 1024   # rows (= batch*channel) per grid step


def _gelu(x):
    return jax.nn.gelu(x, approximate=True)


# ----------------------------- kernel ---------------------------------------
def unitsf_kernel(x_ref, w_in_ref, b_in_ref, w_hid_ref, b_hid_ref,
                  w_eff_ref, b_eff_ref, o_ref):
    # x_ref block: (R, L), one row per (batch, channel) pair, lane-dense on L.
    x = x_ref[...]                                    # (R, L)  fp32

    # --- InstNorm.norm: stats over the time (last/lane) axis, per row ---
    mean = jnp.mean(x, axis=-1, keepdims=True)        # (R, 1)
    xc = x - mean
    var = jnp.mean(xc * xc, axis=-1, keepdims=True)   # (R, 1)
    veps = var + EPS
    inv_std = jax.lax.rsqrt(veps)                     # EUP slot
    std = veps * inv_std                              # == sqrt(veps), no extra EUP op
    xn = xc * inv_std                                 # (R, L)

    # --- MLP over time dim: L -> D -> D (gelu after each) ---
    h = _gelu(jnp.dot(xn, w_in_ref[...],
                      preferred_element_type=jnp.float32) + b_in_ref[...])   # (R, D)
    h = _gelu(jnp.dot(h, w_hid_ref[...],
                      preferred_element_type=jnp.float32) + b_hid_ref[...])  # (R, D)

    # --- fused (w_out @ w_proj): D -> P in one MXU pass ---
    z = jnp.dot(h, w_eff_ref[...],
                preferred_element_type=jnp.float32) + b_eff_ref[...]          # (R, P)

    # --- InstNorm.denorm, contiguous (R, P) store ---
    o_ref[...] = (z * std + mean).astype(o_ref.dtype)


# ----------------------------- wrapper ---------------------------------------
def _pick_row_tile(rows):
    """Largest row tile <= MAX_ROW_TILE (multiple of 8) that evenly divides rows."""
    if rows <= MAX_ROW_TILE:
        return rows
    t = MAX_ROW_TILE - (MAX_ROW_TILE % 8)
    while t >= 8:
        if rows % t == 0:
            return t
        t -= 8
    return rows  # fallback: single block


@jax.jit
def unitsf_forward(x, params):
    B, L, C = x.shape

    # Algebraic fusion of the last two linears (no nonlinearity between them).
    w_eff = params["w_out"] @ params["w_proj"]                      # (D, P)
    b_eff = params["b_out"] @ params["w_proj"] + params["b_proj"]   # (1, P)
    P = w_eff.shape[1]

    # Layout plumbing in XLA: (B, L, C) -> (B, C, L) -> (B*C, L)
    rows = B * C
    x2 = jnp.transpose(x, (0, 2, 1)).reshape(rows, L)

    rt = _pick_row_tile(rows)
    grid = (rows // rt,)

    full = lambda a: pl.BlockSpec(a.shape, lambda i: (0, 0))

    out2 = pl.pallas_call(
        unitsf_kernel,
        out_shape=jax.ShapeDtypeStruct((rows, P), jnp.float32),
        grid_spec=pltpu.PrefetchScalarGridSpec(
            num_scalar_prefetch=0,
            grid=grid,
            in_specs=[
                pl.BlockSpec((rt, L), lambda i: (i, 0)),  # x rows
                full(params["w_in"]), full(params["b_in"]),
                full(params["w_hid"]), full(params["b_hid"]),
                full(w_eff), full(b_eff),
            ],
            out_specs=pl.BlockSpec((rt, P), lambda i: (i, 0)),
        ),
        compiler_params=pltpu.CompilerParams(
            dimension_semantics=("parallel",)),
    )(x2, params["w_in"], params["b_in"], params["w_hid"], params["b_hid"],
      w_eff, b_eff)

    # Back to the module's output layout (B, pred_len, C) in the wrapper.
    return jnp.transpose(out2.reshape(B, C, P), (0, 2, 1))


# --------------------------- pure-JAX reference ------------------------------
def unitsf_reference(x, params):
    mean = jnp.mean(x, axis=1, keepdims=True)
    xc = x - mean
    std = jnp.sqrt(jnp.var(x, axis=1, keepdims=True) + EPS)
    xn = xc / std                                                  # (B, L, C)

    h = jnp.transpose(xn, (0, 2, 1))                               # (B, C, L)
    h = _gelu(h @ params["w_in"] + params["b_in"])                 # (B, C, D)
    h = _gelu(h @ params["w_hid"] + params["b_hid"])               # (B, C, D)
    h = h @ params["w_out"] + params["b_out"]                      # (B, C, L)
    z = h @ params["w_proj"] + params["b_proj"]                    # (B, C, P)
    out = jnp.transpose(z, (0, 2, 1))                              # (B, P, C)
    return out * std + mean


# ----------------------------- param init ------------------------------------
def init_params(key):
    def linear(k, fan_in, fan_out):
        kw, kb = jax.random.split(k)
        bound = 1.0 / jnp.sqrt(fan_in)
        w = jax.random.uniform(kw, (fan_in, fan_out), jnp.float32, -bound, bound)
        b = jax.random.uniform(kb, (1, fan_out), jnp.float32, -bound, bound)
        return w, b

    k = jax.random.split(key, 4)
    w_in, b_in = linear(k[0], SEQ_LEN, D_MODEL)       # Linear(model_in_size, d_model)
    w_hid, b_hid = linear(k[1], D_MODEL, D_MODEL)     # hidden layer (e_layers - 1 = 1)
    w_out, b_out = linear(k[2], D_MODEL, SEQ_LEN)     # Linear(d_model, model_in_size)
    w_proj, b_proj = linear(k[3], SEQ_LEN, PRED_LEN)  # proj_l: Linear(seq_len, pred_len)
    return dict(w_in=w_in, b_in=b_in, w_hid=w_hid, b_hid=b_hid,
                w_out=w_out, b_out=b_out, w_proj=w_proj, b_proj=b_proj)


# --------------------------------- main ---------------------------------------
if __name__ == "__main__":
    key = jax.random.PRNGKey(0)
    kx, kp = jax.random.split(key)

    B = 2
    x = jax.random.normal(kx, (B, SEQ_LEN, ENC_IN), jnp.float32)   # [B, L, C]
    params = init_params(kp)

    out = unitsf_forward(x, params)
    out = jax.block_until_ready(out)

    ref = unitsf_reference(x, params)
    assert out.shape == (B, PRED_LEN, ENC_IN)
    assert jnp.allclose(out, ref, atol=1e-4, rtol=1e-4), "mismatch vs reference"

    print("KERNEL_OK")
</pallas_src>

<mosaic_0001>
module attributes {stable_mosaic.version = 11 : i64} {
  func.func @unitsf_kernel(%arg0: i32, %arg1: memref<8x16xf32, #tpu.memory_space<vmem>>, %arg2: memref<16x32xf32, #tpu.memory_space<vmem>>, %arg3: memref<1x32xf32, #tpu.memory_space<vmem>>, %arg4: memref<32x32xf32, #tpu.memory_space<vmem>>, %arg5: memref<1x32xf32, #tpu.memory_space<vmem>>, %arg6: memref<32x8xf32, #tpu.memory_space<vmem>>, %arg7: memref<1x8xf32, #tpu.memory_space<vmem>>, %arg8: memref<8x8xf32, #tpu.memory_space<vmem>>) attributes {dimension_semantics = [#tpu.dimension_semantics<parallel>], iteration_bounds = array<i64: 1>, scalar_prefetch = 0 : i64, scratch_operands = 0 : i64, tpu.core_type = #tpu.core_type<tc>, window_params = [{transform_indices = @transform_0, window_bounds = array<i64: 8, 16>}, {pipeline_mode = #tpu.pipeline_mode<synchronous>, transform_indices = @transform_1, window_bounds = array<i64: 16, 32>}, {pipeline_mode = #tpu.pipeline_mode<synchronous>, transform_indices = @transform_2, window_bounds = array<i64: 1, 32>}, {pipeline_mode = #tpu.pipeline_mode<synchronous>, transform_indices = @transform_3, window_bounds = array<i64: 32, 32>}, {pipeline_mode = #tpu.pipeline_mode<synchronous>, transform_indices = @transform_4, window_bounds = array<i64: 1, 32>}, {pipeline_mode = #tpu.pipeline_mode<synchronous>, transform_indices = @transform_5, window_bounds = array<i64: 32, 8>}, {pipeline_mode = #tpu.pipeline_mode<synchronous>, transform_indices = @transform_6, window_bounds = array<i64: 1, 8>}, {transform_indices = @transform_7, window_bounds = array<i64: 8, 8>}]} {
    %c0 = arith.constant 0 : index
    %c0_0 = arith.constant 0 : index
    %0 = vector.load %arg1[%c0, %c0_0] : memref<8x16xf32, #tpu.memory_space<vmem>>, vector<8x16xf32>
    %cst = arith.constant dense<0.000000e+00> : vector<8xf32>
    %1 = vector.multi_reduction <add>, %0, %cst [1] : vector<8x16xf32> to vector<8xf32>
    %2 = vector.shape_cast %1 : vector<8xf32> to vector<8x1xf32>
    %cst_1 = arith.constant 1.600000e+01 : f32
    %3 = vector.broadcast %cst_1 : f32 to vector<8x1xf32>
    %4 = arith.divf %2, %3 : vector<8x1xf32>
    %5 = vector.broadcast %4 : vector<8x1xf32> to vector<8x16xf32>
    %6 = arith.subf %0, %5 : vector<8x16xf32>
    %7 = arith.mulf %6, %6 : vector<8x16xf32>
    %cst_2 = arith.constant dense<0.000000e+00> : vector<8xf32>
    %8 = vector.multi_reduction <add>, %7, %cst_2 [1] : vector<8x16xf32> to vector<8xf32>
    %9 = vector.shape_cast %8 : vector<8xf32> to vector<8x1xf32>
    %cst_3 = arith.constant 1.600000e+01 : f32
    %10 = vector.broadcast %cst_3 : f32 to vector<8x1xf32>
    %11 = arith.divf %9, %10 : vector<8x1xf32>
    %cst_4 = arith.constant 9.99999974E-6 : f32
    %12 = vector.broadcast %cst_4 : f32 to vector<8x1xf32>
    %13 = arith.addf %11, %12 : vector<8x1xf32>
    %14 = math.rsqrt %13 : vector<8x1xf32>
    %15 = arith.mulf %13, %14 : vector<8x1xf32>
    %16 = vector.broadcast %14 : vector<8x1xf32> to vector<8x16xf32>
    %17 = arith.mulf %6, %16 : vector<8x16xf32>
    %c0_5 = arith.constant 0 : index
    %c0_6 = arith.constant 0 : index
    %18 = vector.load %arg2[%c0_5, %c0_6] : memref<16x32xf32, #tpu.memory_space<vmem>>, vector<16x32xf32>
    %cst_7 = arith.constant dense<0.000000e+00> : vector<8x32xf32>
    %19 = tpu.matmul %17, %18, %cst_7 {dimension_numbers = #tpu.dot_dimension_numbers<[1], [0], [0], [1], [0, 0, 1, 1], [], []>} : vector<8x16xf32>, vector<16x32xf32>, vector<8x32xf32> -> vector<8x32xf32>
    %c0_8 = arith.constant 0 : index
    %c0_9 = arith.constant 0 : index
    %20 = vector.load %arg3[%c0_8, %c0_9] : memref<1x32xf32, #tpu.memory_space<vmem>>, vector<1x32xf32>
    %21 = vector.broadcast %20 : vector<1x32xf32> to vector<8x32xf32>
    %22 = arith.addf %19, %21 : vector<8x32xf32>
    %23 = arith.mulf %22, %22 : vector<8x32xf32>
    %24 = arith.mulf %22, %23 : vector<8x32xf32>
    %cst_10 = arith.constant 4.471500e-02 : f32
    %25 = vector.broadcast %cst_10 : f32 to vector<8x32xf32>
    %26 = arith.mulf %25, %24 : vector<8x32xf32>
    %27 = arith.addf %22, %26 : vector<8x32xf32>
    %cst_11 = arith.constant 0.797884583 : f32
    %28 = vector.broadcast %cst_11 : f32 to vector<8x32xf32>
    %29 = arith.mulf %28, %27 : vector<8x32xf32>
    %30 = math.tanh %29 : vector<8x32xf32>
    %cst_12 = arith.constant 1.000000e+00 : f32
    %31 = vector.broadcast %cst_12 : f32 to vector<8x32xf32>
    %32 = arith.addf %31, %30 : vector<8x32xf32>
    %cst_13 = arith.constant 5.000000e-01 : f32
    %33 = vector.broadcast %cst_13 : f32 to vector<8x32xf32>
    %34 = arith.mulf %33, %32 : vector<8x32xf32>
    %35 = arith.mulf %22, %34 : vector<8x32xf32>
    %c0_14 = arith.constant 0 : index
    %c0_15 = arith.constant 0 : index
    %36 = vector.load %arg4[%c0_14, %c0_15] : memref<32x32xf32, #tpu.memory_space<vmem>>, vector<32x32xf32>
    %cst_16 = arith.constant dense<0.000000e+00> : vector<8x32xf32>
    %37 = tpu.matmul %35, %36, %cst_16 {dimension_numbers = #tpu.dot_dimension_numbers<[1], [0], [0], [1], [0, 0, 1, 1], [], []>} : vector<8x32xf32>, vector<32x32xf32>, vector<8x32xf32> -> vector<8x32xf32>
    %c0_17 = arith.constant 0 : index
    %c0_18 = arith.constant 0 : index
    %38 = vector.load %arg5[%c0_17, %c0_18] : memref<1x32xf32, #tpu.memory_space<vmem>>, vector<1x32xf32>
    %39 = vector.broadcast %38 : vector<1x32xf32> to vector<8x32xf32>
    %40 = arith.addf %37, %39 : vector<8x32xf32>
    %41 = arith.mulf %40, %40 : vector<8x32xf32>
    %42 = arith.mulf %40, %41 : vector<8x32xf32>
    %cst_19 = arith.constant 4.471500e-02 : f32
    %43 = vector.broadcast %cst_19 : f32 to vector<8x32xf32>
    %44 = arith.mulf %43, %42 : vector<8x32xf32>
    %45 = arith.addf %40, %44 : vector<8x32xf32>
    %cst_20 = arith.constant 0.797884583 : f32
    %46 = vector.broadcast %cst_20 : f32 to vector<8x32xf32>
    %47 = arith.mulf %46, %45 : vector<8x32xf32>
    %48 = math.tanh %47 : vector<8x32xf32>
    %cst_21 = arith.constant 1.000000e+00 : f32
    %49 = vector.broadcast %cst_21 : f32 to vector<8x32xf32>
    %50 = arith.addf %49, %48 : vector<8x32xf32>
    %cst_22 = arith.constant 5.000000e-01 : f32
    %51 = vector.broadcast %cst_22 : f32 to vector<8x32xf32>
    %52 = arith.mulf %51, %50 : vector<8x32xf32>
    %53 = arith.mulf %40, %52 : vector<8x32xf32>
    %c0_23 = arith.constant 0 : index
    %c0_24 = arith.constant 0 : index
    %54 = vector.load %arg6[%c0_23, %c0_24] : memref<32x8xf32, #tpu.memory_space<vmem>>, vector<32x8xf32>
    %cst_25 = arith.constant dense<0.000000e+00> : vector<8x8xf32>
    %55 = tpu.matmul %53, %54, %cst_25 {dimension_numbers = #tpu.dot_dimension_numbers<[1], [0], [0], [1], [0, 0, 1, 1], [], []>} : vector<8x32xf32>, vector<32x8xf32>, vector<8x8xf32> -> vector<8x8xf32>
    %c0_26 = arith.constant 0 : index
    %c0_27 = arith.constant 0 : index
    %56 = vector.load %arg7[%c0_26, %c0_27] : memref<1x8xf32, #tpu.memory_space<vmem>>, vector<1x8xf32>
    %57 = vector.broadcast %56 : vector<1x8xf32> to vector<8x8xf32>
    %58 = arith.addf %55, %57 : vector<8x8xf32>
    %59 = vector.broadcast %15 : vector<8x1xf32> to vector<8x8xf32>
    %60 = arith.mulf %58, %59 : vector<8x8xf32>
    %61 = vector.broadcast %4 : vector<8x1xf32> to vector<8x8xf32>
    %62 = arith.addf %60, %61 : vector<8x8xf32>
    %c0_28 = arith.constant 0 : index
    %c0_29 = arith.constant 0 : index
    %63 = vector.load %arg8[%c0_28, %c0_29] : memref<8x8xf32, #tpu.memory_space<vmem>>, vector<8x8xf32>
    tpu.vector_store %arg8[%c0_28, %c0_29], %62 {strides = array<i32>} : memref<8x8xf32, #tpu.memory_space<vmem>>, vector<8x8xf32>,
    return
  }
  func.func @transform_0(%arg0: i32) -> (i32, i32) {
    %c0_i32 = arith.constant 0 : i32
    %c0_i32_0 = arith.constant 0 : i32
    return %arg0, %c0_i32 : i32, i32
  }
  func.func @transform_1(%arg0: i32) -> (i32, i32) {
    %c0_i32 = arith.constant 0 : i32
    %c0_i32_0 = arith.constant 0 : i32
    %c0_i32_1 = arith.constant 0 : i32
    return %c0_i32, %c0_i32_0 : i32, i32
  }
  func.func @transform_2(%arg0: i32) -> (i32, i32) {
    %c0_i32 = arith.constant 0 : i32
    %c0_i32_0 = arith.constant 0 : i32
    %c0_i32_1 = arith.constant 0 : i32
    return %c0_i32, %c0_i32_0 : i32, i32
  }
  func.func @transform_3(%arg0: i32) -> (i32, i32) {
    %c0_i32 = arith.constant 0 : i32
    %c0_i32_0 = arith.constant 0 : i32
    %c0_i32_1 = arith.constant 0 : i32
    return %c0_i32, %c0_i32_0 : i32, i32
  }
  func.func @transform_4(%arg0: i32) -> (i32, i32) {
    %c0_i32 = arith.constant 0 : i32
    %c0_i32_0 = arith.constant 0 : i32
    %c0_i32_1 = arith.constant 0 : i32
    return %c0_i32, %c0_i32_0 : i32, i32
  }
  func.func @transform_5(%arg0: i32) -> (i32, i32) {
    %c0_i32 = arith.constant 0 : i32
    %c0_i32_0 = arith.constant 0 : i32
    %c0_i32_1 = arith.constant 0 : i32
    return %c0_i32, %c0_i32_0 : i32, i32
  }
  func.func @transform_6(%arg0: i32) -> (i32, i32) {
    %c0_i32 = arith.constant 0 : i32
    %c0_i32_0 = arith.constant 0 : i32
    %c0_i32_1 = arith.constant 0 : i32
    return %c0_i32, %c0_i32_0 : i32, i32
  }
  func.func @transform_7(%arg0: i32) -> (i32, i32) {
    %c0_i32 = arith.constant 0 : i32
    %c0_i32_0 = arith.constant 0 : i32
    return %arg0, %c0_i32 : i32, i32
  }
}

</mosaic_0001>

<llo_original>
// kernel: unitsf_forward.1
$region0: #{unitsf_forward.1}
  #allocation0 [shape = 'u32[]', space=smem, size = 0x4, offset = 0x4, fixed_abs, tag = 'smem constant byte address 0x4 - core index']
  #allocation1 [shape = 'u32[72,128]{1,0:T(1,128)}', space=vmem, size = 0x9000, scoped, tag = 'internal scratch']
  %s0 = inlined_call_operand.vmem [shape: f32[8,16], index: 0, kind: input, shape index: {}]
  %s1 = inlined_call_operand.vmem [shape: f32[16,32], index: 1, kind: input, shape index: {}]
  %s2 = inlined_call_operand.vmem [shape: f32[1,32], index: 2, kind: input, shape index: {}]
  %s3 = inlined_call_operand.vmem [shape: f32[32,32], index: 3, kind: input, shape index: {}]
  %s4 = inlined_call_operand.vmem [shape: f32[1,32], index: 4, kind: input, shape index: {}]
  %s5 = inlined_call_operand.vmem [shape: f32[32,8], index: 5, kind: input, shape index: {}]
  %s6 = inlined_call_operand.vmem [shape: f32[1,8], index: 6, kind: input, shape index: {}]
  %s7 = inlined_call_operand.hbm [shape: f32[8,8], index: 7, kind: output, shape index: {}]
  %s8 = sld [smem:[#allocation0]]
  $region38: #{unitsf_forward.1} parent=0
    _
  %s10 = ssub.s32 1, %s8
  %s11 = scalar_select 0, %s10, %s8
  $region1: #{unitsf_forward.1} parent=0
    #allocation2 [shape = 'u8[4096]{0}', space=vmem, size = 0x1000, scoped, tag = 'output window, operand 0, single buffered']
    #allocation3 [shape = 's32[1]{0}', space=sflag, size = 0x4, scoped, tag = 'scoped memory for unitsf_forward.1']
    %12 = vsyncpa [#allocation3], 0
    // Predicated region
    $region2: #{unitsf_forward.1} parent=1 // pred_check
      _
    $region3: #{unitsf_forward.1} parent=1 // pred_check_branch
      %14 = sbr.rel (0) target = $region5
    $region4: #{unitsf_forward.1} parent=1 // pred_region
      _
    $region5: #{unitsf_forward.1} parent=1 // pred_fallthru
      _
    // Predicated region
    $region6: #{unitsf_forward.1} parent=1 // pred_check
      _
    $region7: #{unitsf_forward.1} parent=1 // pred_check_branch
      %16 = sbr.rel (0) target = $region9
    $region8: #{unitsf_forward.1} parent=1 // pred_region
      _
    $region9: #{unitsf_forward.1} parent=1 // pred_fallthru
      _
    // Predicated region
    $region10: #{unitsf_forward.1} parent=1 // pred_check
      _
    $region11: #{unitsf_forward.1} parent=1 // pred_check_branch
      %18 = sbr.rel (0) target = $region13
    $region12: #{unitsf_forward.1} parent=1 // pred_region
      _
    $region13: #{unitsf_forward.1} parent=1 // pred_fallthru
      _
    // Predicated region
    $region14: #{unitsf_forward.1} parent=1 // pred_check
      _
    $region15: #{unitsf_forward.1} parent=1 // pred_check_branch
      %20 = sbr.rel (0) target = $region17
    $region16: #{unitsf_forward.1} parent=1 // pred_region
      _
    $region17: #{unitsf_forward.1} parent=1 // pred_fallthru
      _
    // Predicated region
    $region18: #{unitsf_forward.1} parent=1 // pred_check
      _
    $region19: #{unitsf_forward.1} parent=1 // pred_check_branch
      %22 = sbr.rel (0) target = $region21
    $region20: #{unitsf_forward.1} parent=1 // pred_region
      _
    $region21: #{unitsf_forward.1} parent=1 // pred_fallthru
      _
    // Predicated region
    $region22: #{unitsf_forward.1} parent=1 // pred_check
      _
    $region23: #{unitsf_forward.1} parent=1 // pred_check_branch
      %24 = sbr.rel (0) target = $region25
    $region24: #{unitsf_forward.1} parent=1 // pred_region
      _
    $region25: #{unitsf_forward.1} parent=1 // pred_fallthru
      _
    // Predicated region
    $region26: #{unitsf_forward.1} parent=1 // pred_check
      _
    $region27: #{unitsf_forward.1} parent=1 // pred_check_branch
      %26 = sbr.rel (0) target = $region29
    $region28: #{unitsf_forward.1} parent=1 // pred_region
      _
    $region29: #{unitsf_forward.1} parent=1 // pred_fallthru
      _
    %v27 = vld [vmem:[%s0] sm:$0xff]
    %vm28 = vcmask 130048
    %v29 = vsel %vm28, %v27, 0.0
    %30 = vadd.xlane.f32.xlu0 %v29
    %v31 = vpop.xlane.xlu0 %30
    %v32 = vrcp.pop 16.0
    %v33 = vmul.f32 16.0, %v32
    %v34 = vsub.f32 1.0, %v33
    %v35 = vmul.f32 %v32, %v34
    %v36 = vadd.f32 %v32, %v35
    %vm37 = vweird.f32 %v32
    %v38 = vsel %vm37, %v32, %v36
    %v39 = vmul.f32 %v31, %v38
    %v40 = vsub.f32 %v27, %v39
    %v41 = vmul.f32 %v40, %v40
    %v42 = vsel %vm28, %v41, 0.0
    %43 = vadd.xlane.f32.xlu0 %v42
    %v44 = vpop.xlane.xlu0 %43
    %v45 = vmul.f32 %v44, %v38
    %v46 = vadd.f32 %v45, 1e-05
    %v47 = vrsqrt.pop %v46
    %v48 = vmul.f32 %v47, %v46
    %v49 = vmul.f32 %v48, %v47
    %v50 = vmul.f32 0.5, %v49
    %v51 = vsub.f32 1.5, %v50
    %v52 = vmul.f32 %v47, %v51
    %vm53 = vweird.f32 %v46
    %vm54 = vweird.f32 %v47
    %vm55 = vmor %vm53, %vm54
    %v56 = vsel %vm55, %v47, %v52
    %v57 = vmul.f32 %v46, %v56
    %v58 = vmul.f32 %v40, %v56
    %v59 = vld [vmem:[%s1] sm:$0xff]
    %v60 = vld [vmem:[%s1 + $0x8] sm:$0xff]
    %v61 = vld [vmem:[%s2] sm:$0x1]
    %v63 = vperm.slane %v61, 0
    %v66 = vsel %vm28, %v58, 0
    %68 = vmatpush.msra.mxu0 0.0
    %69 = vmatpush.msra.mxu0 0.0
    %70 = vmatpush.msra.mxu0 0.0
    %71 = vmatpush.msra.mxu0 0.0
    %72 = vmatpush.msra.mxu0 0.0
    %73 = vmatpush.msra.mxu0 0.0
    %74 = vmatpush.msra.mxu0 0.0
    %75 = vmatpush.msra.mxu0 0.0
    %76 = vmatpush.msra.mxu0 0.0
    %77 = vmatpush.msra.mxu0 0.0
    %78 = vmatpush.msra.mxu0 0.0
    %79 = vmatpush.msra.mxu0 0.0
    %80 = vmatpush.msra.mxu0 0.0
    %81 = vmatpush.msra.mxu0 0.0
    %82 = vmatpush.msra.mxu0 %v60
    %83 = vmatpush.msra.mxu0 %v59
    %84 = vmatmul.f32.gmra.mxu0 %v66
    %v85 = vpop.f32.mrf.mxu0
    %v86 = vadd.f32 %v63, %v85
    %87 = vdwg.mxu0
    %v88 = vmul.f32 %v86, %v86
    %v89 = vmul.f32 %v86, %v88
    %v90 = vmul.f32 %v89, 0.044715
    %v91 = vadd.f32 %v86, %v90
    %v92 = vmul.f32 %v91, 0.7978846
    %v93 = vtanh.pop %v92
    %v94 = vadd.f32 %v93, 1.0
    %v95 = vmul.f32 %v94, 0.5
    %v96 = vmul.f32 %v86, %v95
    %v97 = vld [vmem:[%s3] sm:$0xff]
    %v98 = vld [vmem:[%s3 + $0x8] sm:$0xff]
    %v99 = vld [vmem:[%s3 + $0x10] sm:$0xff]
    %v100 = vld [vmem:[%s3 + $0x18] sm:$0xff]
    %v101 = vld [vmem:[%s4] sm:$0x1]
    %v103 = vperm.slane %v101, 0
    %vm105 = vcmask 261120
    %v107 = vsel %vm105, %v96, 0
    %109 = vmatpush.msra.mxu0 0.0
    %110 = vmatpush.msra.mxu0 0.0
    %111 = vmatpush.msra.mxu0 0.0
    %112 = vmatpush.msra.mxu0 0.0
    %113 = vmatpush.msra.mxu0 0.0
    %114 = vmatpush.msra.mxu0 0.0
    %115 = vmatpush.msra.mxu0 0.0
    %116 = vmatpush.msra.mxu0 0.0
    %117 = vmatpush.msra.mxu0 0.0
    %118 = vmatpush.msra.mxu0 0.0
    %119 = vmatpush.msra.mxu0 0.0
    %120 = vmatpush.msra.mxu0 0.0
    %121 = vmatpush.msra.mxu0 %v100
    %122 = vmatpush.msra.mxu0 %v99
    %123 = vmatpush.msra.mxu0 %v98
    %124 = vmatpush.msra.mxu0 %v97
    %125 = vmatmul.f32.gmra.mxu0 %v107
    %v126 = vpop.f32.mrf.mxu0
    %v127 = vadd.f32 %v103, %v126
    %128 = vdwg.mxu0
    %v129 = vmul.f32 %v127, %v127
    %v130 = vmul.f32 %v127, %v129
    %v131 = vmul.f32 %v130, 0.044715
    %v132 = vadd.f32 %v127, %v131
    %v133 = vmul.f32 %v132, 0.7978846
    %v134 = vtanh.pop %v133
    %v135 = vadd.f32 %v134, 1.0
    %v136 = vmul.f32 %v135, 0.5
    %v137 = vmul.f32 %v127, %v136
    %v138 = vld [vmem:[%s5] sm:$0xff]
    %v139 = vld [vmem:[%s5 + $0x8] sm:$0xff]
    %v140 = vld [vmem:[%s5 + $0x10] sm:$0xff]
    %v141 = vld [vmem:[%s5 + $0x18] sm:$0xff]
    %v142 = vld [vmem:[%s6] sm:$0x1]
    %v144 = vperm.slane %v142, 0
    %v147 = vsel %vm105, %v137, 0
    %149 = vmatpush.msra.mxu0 0.0
    %150 = vmatpush.msra.mxu0 0.0
    %151 = vmatpush.msra.mxu0 0.0
    %152 = vmatpush.msra.mxu0 0.0
    %153 = vmatpush.msra.mxu0 0.0
    %154 = vmatpush.msra.mxu0 0.0
    %155 = vmatpush.msra.mxu0 0.0
    %156 = vmatpush.msra.mxu0 0.0
    %157 = vmatpush.msra.mxu0 0.0
    %158 = vmatpush.msra.mxu0 0.0
    %159 = vmatpush.msra.mxu0 0.0
    %160 = vmatpush.msra.mxu0 0.0
    %161 = vmatpush.msra.mxu0 %v141
    %162 = vmatpush.msra.mxu0 %v140
    %163 = vmatpush.msra.mxu0 %v139
    %164 = vmatpush.msra.mxu0 %v138
    %165 = vmatmul.f32.gmra.mxu0 %v147
    %v166 = vpop.f32.mrf.mxu0
    %v167 = vadd.f32 %v144, %v166
    %168 = vdwg.mxu0
    %v169 = vmul.f32 %v167, %v57
    %v170 = vadd.f32 %v169, %v39
    %vm171 = vcmask 64512
    %172 = vst.msk [vmem:[#allocation2] sm:$0xff] %vm171, %v170
    // Predicated region
    $region30: #{unitsf_forward.1} parent=1 // pred_check
      _
    $region31: #{unitsf_forward.1} parent=1 // pred_check_branch
      %174 = sbr.rel (0) target = $region33
    $region32: #{unitsf_forward.1} parent=1 // pred_region
      %176 = vsyncadd [#allocation3], 0
      %s178 = sshll.u32 [#allocation2], 4
      %s179 = int_to_ptr.vmem [resolvable:$true] %s178
      %s180 = sshll.u32 %s7, 4
      %s181 = int_to_ptr.hbm [resolvable:$true] %s180
      %183 = dma.vmem_to_hbm [thread:$0]  %s179, 128, %s181, [#allocation3]
    $region33: #{unitsf_forward.1} parent=1 // pred_fallthru
      _
    // Predicated region
    $region34: #{unitsf_forward.1} parent=1 // pred_check
      _
    $region35: #{unitsf_forward.1} parent=1 // pred_check_branch
      %185 = sbr.rel (0) target = $region37
    $region36: #{unitsf_forward.1} parent=1 // pred_region
      %187 = dma.done [#allocation3], 128
    $region37: #{unitsf_forward.1} parent=1 // pred_fallthru
      _
    %188 = vsyncpa [#allocation3], 1

</llo_original>
